<compile_context>
chip_gen: v5e
topology: v5e:2x2
jax: 0.10.0
libtpu: 0.0.40
codegen_flags: <defaults>
</compile_context>

<pallas_src>
import functools

import jax
import jax.numpy as jnp
from jax.experimental import pallas as pl
from jax.experimental.pallas import tpu as pltpu


def _round_up(n, m):
    return ((n + m - 1) // m) * m


def _clip_tail_kernel(x_ref, gamma_ref, beta_ref, wproj_ref, o_ref, *, eps):
    # x_ref: (TB, D) gathered (and zero-padded) token rows.
    x = x_ref[...].astype(jnp.float32)                       # (TB, D)
    mean = jnp.mean(x, axis=-1, keepdims=True)
    xc = x - mean
    var = jnp.mean(xc * xc, axis=-1, keepdims=True)          # biased variance (torch LayerNorm)
    xn = xc * jax.lax.rsqrt(var + eps)
    y = xn * gamma_ref[...] + beta_ref[...]                  # (TB, D), f32
    # Feed the MXU in the model dtype (bf16 native path when x is bf16), accumulate in f32.
    out = jnp.dot(y.astype(wproj_ref.dtype), wproj_ref[...],
                  preferred_element_type=jnp.float32)        # (TB, Ppad)
    o_ref[...] = out.astype(o_ref.dtype)


def clip_tail(x, inputs, gamma, beta, w_proj, *, eps=1e-5):
    """x: (B, S, D) hidden states; inputs: (B, S) integer token ids.
    gamma, beta: (D,) final_layer_norm affine parameters.
    w_proj: (D, P) projection matrix (== torch text_projection.weight.T, no bias).
    Returns (B, P) = text_proj(LayerNorm(x)[0, inputs.argmax(-1)]).
    """
    B, S, D = x.shape
    P = w_proj.shape[1]
    Ppad = _round_up(P, 128)

    # Tiny integer argmax + B-row gather: hoisted to the wrapper (trivial XLA ops).
    # LayerNorm is per-row over D, so gather-then-normalize == normalize-then-gather.
    pos = jnp.argmax(inputs, axis=-1)                        # (B,) EOS positions
    x0g = jnp.take(x[0], pos, axis=0)                        # (B, D): rows of batch entry 0

    # Batch tile: round rows up to a sublane multiple; one (TB, D) tile per grid step.
    B8 = _round_up(B, 8)
    TB = min(B8, 256)
    Bpad = _round_up(B8, TB)
    if Bpad != B:
        x0g = jnp.pad(x0g, ((0, Bpad - B), (0, 0)))          # zero rows -> finite, sliced off

    gamma2 = gamma.reshape(1, D).astype(jnp.float32)
    beta2 = beta.reshape(1, D).astype(jnp.float32)
    w_pad = w_proj.astype(x.dtype)                           # model dtype for the MXU
    if Ppad != P:
        w_pad = jnp.pad(w_pad, ((0, 0), (0, Ppad - P)))      # lane-dense output columns

    nsteps = Bpad // TB
    kernel = functools.partial(_clip_tail_kernel, eps=eps)

    out = pl.pallas_call(
        kernel,
        out_shape=jax.ShapeDtypeStruct((Bpad, Ppad), x.dtype),
        grid=(nsteps,),
        in_specs=[
            pl.BlockSpec((TB, D), lambda i: (i, 0)),         # gathered rows, batch-tiled
            pl.BlockSpec((1, D), lambda i: (0, 0)),          # gamma (resident)
            pl.BlockSpec((1, D), lambda i: (0, 0)),          # beta  (resident)
            pl.BlockSpec((D, Ppad), lambda i: (0, 0)),       # proj weight (resident)
        ],
        out_specs=pl.BlockSpec((TB, Ppad), lambda i: (i, 0)),
        compiler_params=pltpu.CompilerParams(dimension_semantics=("parallel",)),
    )(x0g, gamma2, beta2, w_pad)

    return out[:B, :P]


def _reference(x, inputs, gamma, beta, w_proj, eps=1e-5):
    mean = jnp.mean(x, axis=-1, keepdims=True)
    var = jnp.mean((x - mean) ** 2, axis=-1, keepdims=True)
    xn = (x - mean) * jax.lax.rsqrt(var + eps)
    xn = xn * gamma + beta
    pooled = xn[0, jnp.argmax(inputs, axis=-1)]              # (B, D)
    return pooled @ w_proj                                   # (B, P)


if __name__ == "__main__":
    # Small synthetic shapes consistent with the module
    # (real CLIP-L text tail: S=77, D=768, P=768 -- already lane-aligned).
    B, S, D, P = 2, 8, 32, 16

    key = jax.random.PRNGKey(0)
    k_x, k_ids, k_g, k_b, k_w = jax.random.split(key, 5)

    x = jax.random.normal(k_x, (B, S, D), dtype=jnp.float32)
    inputs = jax.random.randint(k_ids, (B, S), 0, 1000, dtype=jnp.int32)

    # Deterministic synthetic parameters (shapes match final_layer_norm and text_projection).
    gamma = 1.0 + 0.1 * jax.random.normal(k_g, (D,), dtype=jnp.float32)
    beta = 0.1 * jax.random.normal(k_b, (D,), dtype=jnp.float32)
    w_proj = 0.05 * jax.random.normal(k_w, (D, P), dtype=jnp.float32)   # == torch weight.T

    out = clip_tail(x, inputs, gamma, beta, w_proj)
    out = jax.block_until_ready(out)

    ref = _reference(x, inputs, gamma, beta, w_proj)
    assert out.shape == (B, P), out.shape
    assert jnp.allclose(out, ref, atol=1e-5, rtol=1e-5), float(jnp.max(jnp.abs(out - ref)))

    print("KERNEL_OK")
</pallas_src>

<mosaic_0001>
module attributes {stable_mosaic.version = 11 : i64} {
  func.func @_clip_tail_kernel(%arg0: i32, %arg1: memref<8x32xf32, #tpu.memory_space<vmem>>, %arg2: memref<1x32xf32, #tpu.memory_space<vmem>>, %arg3: memref<1x32xf32, #tpu.memory_space<vmem>>, %arg4: memref<32x128xf32, #tpu.memory_space<vmem>>, %arg5: memref<8x128xf32, #tpu.memory_space<vmem>>) attributes {dimension_semantics = [#tpu.dimension_semantics<parallel>], iteration_bounds = array<i64: 1>, scalar_prefetch = 0 : i64, scratch_operands = 0 : i64, tpu.core_type = #tpu.core_type<tc>, window_params = [{transform_indices = @transform_0, window_bounds = array<i64: 8, 32>}, {pipeline_mode = #tpu.pipeline_mode<synchronous>, transform_indices = @transform_1, window_bounds = array<i64: 1, 32>}, {pipeline_mode = #tpu.pipeline_mode<synchronous>, transform_indices = @transform_2, window_bounds = array<i64: 1, 32>}, {pipeline_mode = #tpu.pipeline_mode<synchronous>, transform_indices = @transform_3, window_bounds = array<i64: 32, 128>}, {transform_indices = @transform_4, window_bounds = array<i64: 8, 128>}]} {
    %c0 = arith.constant 0 : index
    %c0_0 = arith.constant 0 : index
    %0 = vector.load %arg1[%c0, %c0_0] : memref<8x32xf32, #tpu.memory_space<vmem>>, vector<8x32xf32>
    %cst = arith.constant dense<0.000000e+00> : vector<8xf32>
    %1 = vector.multi_reduction <add>, %0, %cst [1] : vector<8x32xf32> to vector<8xf32>
    %2 = vector.shape_cast %1 : vector<8xf32> to vector<8x1xf32>
    %cst_1 = arith.constant 3.200000e+01 : f32
    %3 = vector.broadcast %cst_1 : f32 to vector<8x1xf32>
    %4 = arith.divf %2, %3 : vector<8x1xf32>
    %5 = vector.broadcast %4 : vector<8x1xf32> to vector<8x32xf32>
    %6 = arith.subf %0, %5 : vector<8x32xf32>
    %7 = arith.mulf %6, %6 : vector<8x32xf32>
    %cst_2 = arith.constant dense<0.000000e+00> : vector<8xf32>
    %8 = vector.multi_reduction <add>, %7, %cst_2 [1] : vector<8x32xf32> to vector<8xf32>
    %9 = vector.shape_cast %8 : vector<8xf32> to vector<8x1xf32>
    %cst_3 = arith.constant 3.200000e+01 : f32
    %10 = vector.broadcast %cst_3 : f32 to vector<8x1xf32>
    %11 = arith.divf %9, %10 : vector<8x1xf32>
    %cst_4 = arith.constant 9.99999974E-6 : f32
    %12 = vector.broadcast %cst_4 : f32 to vector<8x1xf32>
    %13 = arith.addf %11, %12 : vector<8x1xf32>
    %14 = math.rsqrt %13 : vector<8x1xf32>
    %15 = vector.broadcast %14 : vector<8x1xf32> to vector<8x32xf32>
    %16 = arith.mulf %6, %15 : vector<8x32xf32>
    %c0_5 = arith.constant 0 : index
    %c0_6 = arith.constant 0 : index
    %17 = vector.load %arg2[%c0_5, %c0_6] : memref<1x32xf32, #tpu.memory_space<vmem>>, vector<1x32xf32>
    %18 = vector.broadcast %17 : vector<1x32xf32> to vector<8x32xf32>
    %19 = arith.mulf %16, %18 : vector<8x32xf32>
    %c0_7 = arith.constant 0 : index
    %c0_8 = arith.constant 0 : index
    %20 = vector.load %arg3[%c0_7, %c0_8] : memref<1x32xf32, #tpu.memory_space<vmem>>, vector<1x32xf32>
    %21 = vector.broadcast %20 : vector<1x32xf32> to vector<8x32xf32>
    %22 = arith.addf %19, %21 : vector<8x32xf32>
    %c0_9 = arith.constant 0 : index
    %c0_10 = arith.constant 0 : index
    %23 = vector.load %arg4[%c0_9, %c0_10] : memref<32x128xf32, #tpu.memory_space<vmem>>, vector<32x128xf32>
    %cst_11 = arith.constant dense<0.000000e+00> : vector<8x128xf32>
    %24 = tpu.matmul %22, %23, %cst_11 {dimension_numbers = #tpu.dot_dimension_numbers<[1], [0], [0], [1], [0, 0, 1, 1], [], []>} : vector<8x32xf32>, vector<32x128xf32>, vector<8x128xf32> -> vector<8x128xf32>
    %c0_12 = arith.constant 0 : index
    %c0_13 = arith.constant 0 : index
    %25 = vector.load %arg5[%c0_12, %c0_13] : memref<8x128xf32, #tpu.memory_space<vmem>>, vector<8x128xf32>
    tpu.vector_store %arg5[%c0_12, %c0_13], %24 {strides = array<i32>} : memref<8x128xf32, #tpu.memory_space<vmem>>, vector<8x128xf32>,
    return
  }
  func.func @transform_0(%arg0: i32) -> (i32, i32) {
    %c0_i32 = arith.constant 0 : i32
    %c0_i32_0 = arith.constant 0 : i32
    return %arg0, %c0_i32 : i32, i32
  }
  func.func @transform_1(%arg0: i32) -> (i32, i32) {
    %c0_i32 = arith.constant 0 : i32
    %c0_i32_0 = arith.constant 0 : i32
    %c0_i32_1 = arith.constant 0 : i32
    return %c0_i32, %c0_i32_0 : i32, i32
  }
  func.func @transform_2(%arg0: i32) -> (i32, i32) {
    %c0_i32 = arith.constant 0 : i32
    %c0_i32_0 = arith.constant 0 : i32
    %c0_i32_1 = arith.constant 0 : i32
    return %c0_i32, %c0_i32_0 : i32, i32
  }
  func.func @transform_3(%arg0: i32) -> (i32, i32) {
    %c0_i32 = arith.constant 0 : i32
    %c0_i32_0 = arith.constant 0 : i32
    %c0_i32_1 = arith.constant 0 : i32
    return %c0_i32, %c0_i32_0 : i32, i32
  }
  func.func @transform_4(%arg0: i32) -> (i32, i32) {
    %c0_i32 = arith.constant 0 : i32
    %c0_i32_0 = arith.constant 0 : i32
    return %arg0, %c0_i32 : i32, i32
  }
}

</mosaic_0001>

<llo_original>
// kernel: tpu_custom_call.1
$region0: #{tpu_custom_call.1}
  #allocation0 [shape = 'u32[]', space=smem, size = 0x4, offset = 0x4, fixed_abs, tag = 'smem constant byte address 0x4 - core index']
  #allocation1 [shape = 'u32[72,128]{1,0:T(1,128)}', space=vmem, size = 0x9000, scoped, tag = 'internal scratch']
  %s0 = inlined_call_operand.hbm [shape: f32[8,32], index: 0, kind: input, shape index: {}]
  %s1 = inlined_call_operand.hbm [shape: f32[1,32], index: 1, kind: input, shape index: {}]
  %s2 = inlined_call_operand.vmem [shape: f32[1,32], index: 2, kind: input, shape index: {}]
  %s3 = inlined_call_operand.hbm [shape: f32[32,128], index: 3, kind: input, shape index: {}]
  %s4 = inlined_call_operand.hbm [shape: f32[8,128], index: 4, kind: output, shape index: {}]
  %s5 = sld [smem:[#allocation0]]
  $region38: #{tpu_custom_call.1} parent=0
    _
  %s7 = ssub.s32 1, %s5
  %s8 = scalar_select 0, %s7, %s5
  $region1: #{tpu_custom_call.1} parent=0
    #allocation2 [shape = 'u8[4096]{0}', space=vmem, size = 0x1000, scoped, tag = 'input window, operand 0, single buffered']
    #allocation3 [shape = 's32[1]{0}', space=sflag, size = 0x4, scoped, tag = 'scoped memory for tpu_custom_call.1']
    #allocation4 [shape = 's32[1]{0}', space=sflag, size = 0x4, scoped, tag = 'scoped memory for tpu_custom_call.1']
    #allocation5 [shape = 'u8[512]{0}', space=vmem, size = 0x400, scoped, tag = 'input window, operand 1, single buffered']
    #allocation6 [shape = 's32[1]{0}', space=sflag, size = 0x4, scoped, tag = 'scoped memory for tpu_custom_call.1']
    #allocation7 [shape = 'u8[16384]{0}', space=vmem, size = 0x4000, scoped, tag = 'input window, operand 3, single buffered']
    #allocation8 [shape = 'u8[4096]{0}', space=vmem, size = 0x1000, scoped, tag = 'output window, operand 0, single buffered']
    %9 = vsyncpa [#allocation3], 0
    %10 = vsyncpa [#allocation6], 0
    %11 = vsyncpa [#allocation4], 0
    // Predicated region
    $region2: #{tpu_custom_call.1} parent=1 // pred_check
      _
    $region3: #{tpu_custom_call.1} parent=1 // pred_check_branch
      %13 = sbr.rel (0) target = $region5
    $region4: #{tpu_custom_call.1} parent=1 // pred_region
      %15 = vsyncadd [#allocation3], 0
      %s17 = sshll.u32 %s0, 4
      %s18 = int_to_ptr.hbm [resolvable:$true] %s17
      %s19 = sshll.u32 [#allocation2], 4
      %s20 = int_to_ptr.vmem [resolvable:$true] %s19
      %22 = dma.hbm_to_vmem [thread:$0]  %s18, 128, %s20, [#allocation3]
    $region5: #{tpu_custom_call.1} parent=1 // pred_fallthru
      _
    // Predicated region
    $region6: #{tpu_custom_call.1} parent=1 // pred_check
      _
    $region7: #{tpu_custom_call.1} parent=1 // pred_check_branch
      %24 = sbr.rel (0) target = $region9
    $region8: #{tpu_custom_call.1} parent=1 // pred_region
      %26 = vsyncadd [#allocation6], 0
      %s28 = sshll.u32 %s1, 4
      %s29 = int_to_ptr.hbm [resolvable:$true] %s28
      %s30 = sshll.u32 [#allocation5], 4
      %s31 = int_to_ptr.vmem [resolvable:$true] %s30
      %33 = dma.hbm_to_vmem [thread:$0]  %s29, 16, %s31, [#allocation6]
    $region9: #{tpu_custom_call.1} parent=1 // pred_fallthru
      _
    // Predicated region
    $region10: #{tpu_custom_call.1} parent=1 // pred_check
      _
    $region11: #{tpu_custom_call.1} parent=1 // pred_check_branch
      %35 = sbr.rel (0) target = $region13
    $region12: #{tpu_custom_call.1} parent=1 // pred_region
      _
    $region13: #{tpu_custom_call.1} parent=1 // pred_fallthru
      _
    // Predicated region
    $region14: #{tpu_custom_call.1} parent=1 // pred_check
      _
    $region15: #{tpu_custom_call.1} parent=1 // pred_check_branch
      %37 = sbr.rel (0) target = $region17
    $region16: #{tpu_custom_call.1} parent=1 // pred_region
      %39 = vsyncadd [#allocation6], 0
      %s40 = sshll.u32 %s3, 4
      %s41 = int_to_ptr.hbm [resolvable:$true] %s40
      %s42 = sshll.u32 [#allocation7], 4
      %s43 = int_to_ptr.vmem [resolvable:$true] %s42
      %48 = dma.hbm_to_vmem [thread:$0]  %s41, 512, %s43, [#allocation6], 128, 128, 8
    $region17: #{tpu_custom_call.1} parent=1 // pred_fallthru
      _
    // Predicated region
    $region18: #{tpu_custom_call.1} parent=1 // pred_check
      _
    $region19: #{tpu_custom_call.1} parent=1 // pred_check_branch
      %50 = sbr.rel (0) target = $region21
    $region20: #{tpu_custom_call.1} parent=1 // pred_region
      %52 = dma.done [#allocation3], 128
    $region21: #{tpu_custom_call.1} parent=1 // pred_fallthru
      _
    // Predicated region
    $region22: #{tpu_custom_call.1} parent=1 // pred_check
      _
    $region23: #{tpu_custom_call.1} parent=1 // pred_check_branch
      %54 = sbr.rel (0) target = $region25
    $region24: #{tpu_custom_call.1} parent=1 // pred_region
      %56 = dma.done [#allocation6], 16
    $region25: #{tpu_custom_call.1} parent=1 // pred_fallthru
      _
    // Predicated region
    $region26: #{tpu_custom_call.1} parent=1 // pred_check
      _
    $region27: #{tpu_custom_call.1} parent=1 // pred_check_branch
      %58 = sbr.rel (0) target = $region29
    $region28: #{tpu_custom_call.1} parent=1 // pred_region
      %60 = dma.done [#allocation6], 512
    $region29: #{tpu_custom_call.1} parent=1 // pred_fallthru
      _
    %v61 = vld [vmem:[#allocation2] sm:$0xff]
    %vm62 = vcmask 261120
    %v63 = vsel %vm62, %v61, 0.0
    %64 = vadd.xlane.f32.xlu0 %v63
    %v65 = vpop.xlane.xlu0 %64
    %v66 = vrcp.pop 32.0
    %v67 = vmul.f32 32.0, %v66
    %v68 = vsub.f32 1.0, %v67
    %v69 = vmul.f32 %v66, %v68
    %v70 = vadd.f32 %v66, %v69
    %vm71 = vweird.f32 %v66
    %v72 = vsel %vm71, %v66, %v70
    %v73 = vmul.f32 %v65, %v72
    %v74 = vsub.f32 %v61, %v73
    %v75 = vmul.f32 %v74, %v74
    %v76 = vsel %vm62, %v75, 0.0
    %77 = vadd.xlane.f32.xlu0 %v76
    %v78 = vpop.xlane.xlu0 %77
    %v79 = vmul.f32 %v78, %v72
    %v80 = vadd.f32 %v79, 1e-05
    %v81 = vrsqrt.pop %v80
    %v82 = vmul.f32 %v81, %v80
    %v83 = vmul.f32 %v82, %v81
    %v84 = vmul.f32 0.5, %v83
    %v85 = vsub.f32 1.5, %v84
    %v86 = vmul.f32 %v81, %v85
    %vm87 = vweird.f32 %v80
    %vm88 = vweird.f32 %v81
    %vm89 = vmor %vm87, %vm88
    %v90 = vsel %vm89, %v81, %v86
    %v91 = vmul.f32 %v74, %v90
    %v92 = vld [vmem:[#allocation5] sm:$0x1]
    %v94 = vperm.slane %v92, 0
    %v96 = vmul.f32 %v91, %v94
    %v97 = vld [vmem:[%s2] sm:$0x1]
    %v99 = vperm.slane %v97, 0
    %v101 = vadd.f32 %v96, %v99
    %v102 = vld [vmem:[#allocation7] sm:$0xff]
    %v103 = vld [vmem:[#allocation7 + $0x8] sm:$0xff]
    %v104 = vld [vmem:[#allocation7 + $0x10] sm:$0xff]
    %v105 = vld [vmem:[#allocation7 + $0x18] sm:$0xff]
    %v107 = vsel %vm62, %v101, 0
    %109 = vmatpush.msra.mxu0 0.0
    %110 = vmatpush.msra.mxu0 0.0
    %111 = vmatpush.msra.mxu0 0.0
    %112 = vmatpush.msra.mxu0 0.0
    %113 = vmatpush.msra.mxu0 0.0
    %114 = vmatpush.msra.mxu0 0.0
    %115 = vmatpush.msra.mxu0 0.0
    %116 = vmatpush.msra.mxu0 0.0
    %117 = vmatpush.msra.mxu0 0.0
    %118 = vmatpush.msra.mxu0 0.0
    %119 = vmatpush.msra.mxu0 0.0
    %120 = vmatpush.msra.mxu0 0.0
    %121 = vmatpush.msra.mxu0 %v105
    %122 = vmatpush.msra.mxu0 %v104
    %123 = vmatpush.msra.mxu0 %v103
    %124 = vmatpush.msra.mxu0 %v102
    %125 = vmatmul.f32.gmra.mxu0 %v107
    %v126 = vpop.f32.mrf.mxu0
    %v127 = vadd.f32 0.0, %v126
    %128 = vdwg.mxu0
    %129 = vst [vmem:[#allocation8] sm:$0xff] %v127
    // Predicated region
    $region30: #{tpu_custom_call.1} parent=1 // pred_check
      _
    $region31: #{tpu_custom_call.1} parent=1 // pred_check_branch
      %131 = sbr.rel (0) target = $region33
    $region32: #{tpu_custom_call.1} parent=1 // pred_region
      %133 = vsyncadd [#allocation4], 0
      %s135 = sshll.u32 [#allocation8], 4
      %s136 = int_to_ptr.vmem [resolvable:$true] %s135
      %s137 = sshll.u32 %s4, 4
      %s138 = int_to_ptr.hbm [resolvable:$true] %s137
      %140 = dma.vmem_to_hbm [thread:$0]  %s136, 128, %s138, [#allocation4]
    $region33: #{tpu_custom_call.1} parent=1 // pred_fallthru
      _
    // Predicated region
    $region34: #{tpu_custom_call.1} parent=1 // pred_check
      _
    $region35: #{tpu_custom_call.1} parent=1 // pred_check_branch
      %142 = sbr.rel (0) target = $region37
    $region36: #{tpu_custom_call.1} parent=1 // pred_region
      %144 = dma.done [#allocation4], 128
    $region37: #{tpu_custom_call.1} parent=1 // pred_fallthru
      _
    %145 = vsyncpa [#allocation3], 1
    %146 = vsyncpa [#allocation6], 1
    %147 = vsyncpa [#allocation4], 1

</llo_original>
